<compile_context>
chip_gen: v6e
topology: v6e:2x2x1
jax: 0.10.0
libtpu: 0.0.40
codegen_flags: <defaults>
</compile_context>

<pallas_src>
import functools

import jax
import jax.numpy as jnp
from jax.experimental import pallas as pl
from jax.experimental.pallas import tpu as pltpu


# ---------------------------------------------------------------------------
# LayerNormalization kernel
# ---------------------------------------------------------------------------
def _layernorm_kernel(params_ref, x_ref, o_ref, *, eps: float, d: int):
    # params_ref : SMEM (2,) float32  -> [alpha, bias]
    # x_ref/o_ref: VMEM (TILE_R, D)
    alpha = params_ref[0]
    bias = params_ref[1]

    x = x_ref[...].astype(jnp.float32)                       # (TILE_R, D)
    mean = jnp.mean(x, axis=-1, keepdims=True)                # (TILE_R, 1)
    centered = x - mean
    # torch.std defaults to the unbiased estimator (correction = 1).
    var = jnp.sum(centered * centered, axis=-1, keepdims=True) * (1.0 / (d - 1))
    std = jnp.sqrt(var)
    y = centered * (alpha / (std + eps)) + bias
    o_ref[...] = y.astype(o_ref.dtype)


def _choose_tile_rows(n_rows: int, d: int, itemsize: int,
                      target_bytes: int = 2 << 20) -> int:
    """Pick a row-tile so one block is ~target_bytes, multiple of 8 sublanes."""
    max_rows = max(8, target_bytes // max(1, d * itemsize))
    tile = min(n_rows, max_rows)
    if tile < n_rows:
        tile = max(8, (tile // 8) * 8)      # sublane-aligned; else full dim
    return int(tile)


def layer_normalization(x: jnp.ndarray, alpha, bias, *, eps: float = 1e-6):
    """alpha * (x - mean) / (std + eps) + bias  over the last axis (torch semantics)."""
    orig_shape = x.shape
    d = orig_shape[-1]
    rows = 1
    for s in orig_shape[:-1]:
        rows *= s
    x2 = x.reshape(rows, d)

    tile_r = _choose_tile_rows(rows, d, x2.dtype.itemsize)
    grid = (pl.cdiv(rows, tile_r),)

    params = jnp.stack([jnp.asarray(alpha, jnp.float32).reshape(()),
                        jnp.asarray(bias, jnp.float32).reshape(())])   # (2,)

    out = pl.pallas_call(
        functools.partial(_layernorm_kernel, eps=float(eps), d=int(d)),
        out_shape=jax.ShapeDtypeStruct((rows, d), x.dtype),
        grid=grid,
        in_specs=[
            pl.BlockSpec(memory_space=pltpu.MemorySpace.SMEM),          # params
            pl.BlockSpec((tile_r, d), lambda r: (r, 0)),                # x rows
        ],
        out_specs=pl.BlockSpec((tile_r, d), lambda r: (r, 0)),
        compiler_params=pltpu.CompilerParams(
            dimension_semantics=("parallel",),          # rows independent -> 2 TCs on v7x
            vmem_limit_bytes=32 * 1024 * 1024,
        ),
    )(params, x2)
    return out.reshape(orig_shape)


# ---------------------------------------------------------------------------
# Decoder forward
# ---------------------------------------------------------------------------
def decoder_forward(x, encoder_output, src_mask, tgt_mask, *, layers=(),
                    alpha=1.0, bias=0.0, eps: float = 1e-6):
    # TODO(synk): the decoder-block layers (nn.ModuleList) are not defined in
    # the spec; they are applied here as arbitrary JAX callables, not Pallas.
    for layer in layers:
        x = layer(x, encoder_output, src_mask, tgt_mask)
    return layer_normalization(x, alpha, bias, eps=eps)


# ---------------------------------------------------------------------------
# Demo / correctness check
# ---------------------------------------------------------------------------
if __name__ == "__main__":
    batch, seq, d_model = 2, 8, 32

    key = jax.random.PRNGKey(0)
    kx, ke = jax.random.split(key)
    x = jax.random.normal(kx, (batch, seq, d_model), dtype=jnp.float32)
    encoder_output = jax.random.normal(ke, (batch, seq, d_model), dtype=jnp.float32)
    src_mask = jnp.ones((batch, 1, 1, seq), dtype=jnp.float32)
    tgt_mask = jnp.tril(jnp.ones((seq, seq), dtype=jnp.float32))[None, None, :, :]

    # Stand-in decoder-block layers (real blocks are not part of the spec).
    def layer0(h, enc, sm, tm):
        return h + 0.5 * enc

    def layer1(h, enc, sm, tm):
        return h * 1.1 + 0.01

    layers = (layer0, layer1)
    alpha, bias, eps = 1.0, 0.0, 1e-6

    out = decoder_forward(x, encoder_output, src_mask, tgt_mask,
                          layers=layers, alpha=alpha, bias=bias, eps=eps)
    out = jax.block_until_ready(out)

    # Pure-JAX reference of the torch forward (unbiased std, scalar alpha/bias).
    ref = x
    for layer in layers:
        ref = layer(ref, encoder_output, src_mask, tgt_mask)
    mean = jnp.mean(ref, axis=-1, keepdims=True)
    std = jnp.std(ref, axis=-1, keepdims=True, ddof=1)
    ref = alpha * (ref - mean) / (std + eps) + bias

    assert out.shape == (batch, seq, d_model)
    assert jnp.allclose(out, ref, atol=1e-5, rtol=1e-5), "mismatch vs reference"

    print("KERNEL_OK")
</pallas_src>

<mosaic_0001>
module attributes {stable_mosaic.version = 11 : i64} {
  func.func @_layernorm_kernel(%arg0: i32, %arg1: memref<2xf32, #tpu.memory_space<smem>>, %arg2: memref<16x32xf32, #tpu.memory_space<vmem>>, %arg3: memref<16x32xf32, #tpu.memory_space<vmem>>) attributes {dimension_semantics = [#tpu.dimension_semantics<parallel>], iteration_bounds = array<i64: 1>, scalar_prefetch = 0 : i64, scratch_operands = 0 : i64, tpu.core_type = #tpu.core_type<tc>, window_params = [{transform_indices = @transform_0, window_bounds = array<i64: 2>}, {transform_indices = @transform_1, window_bounds = array<i64: 16, 32>}, {transform_indices = @transform_2, window_bounds = array<i64: 16, 32>}]} {
    %c0 = arith.constant 0 : index
    %0 = memref.load %arg1[%c0] : memref<2xf32, #tpu.memory_space<smem>>
    %c1 = arith.constant 1 : index
    %1 = memref.load %arg1[%c1] : memref<2xf32, #tpu.memory_space<smem>>
    %c0_0 = arith.constant 0 : index
    %c0_1 = arith.constant 0 : index
    %2 = vector.load %arg2[%c0_0, %c0_1] : memref<16x32xf32, #tpu.memory_space<vmem>>, vector<16x32xf32>
    %cst = arith.constant dense<0.000000e+00> : vector<16xf32>
    %3 = vector.multi_reduction <add>, %2, %cst [1] : vector<16x32xf32> to vector<16xf32>
    %4 = vector.shape_cast %3 : vector<16xf32> to vector<16x1xf32>
    %cst_2 = arith.constant 3.200000e+01 : f32
    %5 = vector.broadcast %cst_2 : f32 to vector<16x1xf32>
    %6 = arith.divf %4, %5 : vector<16x1xf32>
    %7 = vector.broadcast %6 : vector<16x1xf32> to vector<16x32xf32>
    %8 = arith.subf %2, %7 : vector<16x32xf32>
    %9 = arith.mulf %8, %8 : vector<16x32xf32>
    %cst_3 = arith.constant dense<0.000000e+00> : vector<16xf32>
    %10 = vector.multi_reduction <add>, %9, %cst_3 [1] : vector<16x32xf32> to vector<16xf32>
    %11 = vector.shape_cast %10 : vector<16xf32> to vector<16x1xf32>
    %cst_4 = arith.constant 0.0322580636 : f32
    %12 = vector.broadcast %cst_4 : f32 to vector<16x1xf32>
    %13 = arith.mulf %11, %12 : vector<16x1xf32>
    %14 = math.sqrt %13 : vector<16x1xf32>
    %cst_5 = arith.constant 9.99999997E-7 : f32
    %15 = vector.broadcast %cst_5 : f32 to vector<16x1xf32>
    %16 = arith.addf %14, %15 : vector<16x1xf32>
    %17 = vector.broadcast %0 : f32 to vector<16x1xf32>
    %18 = arith.divf %17, %16 : vector<16x1xf32>
    %19 = vector.broadcast %18 : vector<16x1xf32> to vector<16x32xf32>
    %20 = arith.mulf %8, %19 : vector<16x32xf32>
    %21 = vector.broadcast %1 : f32 to vector<16x32xf32>
    %22 = arith.addf %20, %21 : vector<16x32xf32>
    %c0_6 = arith.constant 0 : index
    %c0_7 = arith.constant 0 : index
    %23 = vector.load %arg3[%c0_6, %c0_7] : memref<16x32xf32, #tpu.memory_space<vmem>>, vector<16x32xf32>
    tpu.vector_store %arg3[%c0_6, %c0_7], %22 {strides = array<i32>} : memref<16x32xf32, #tpu.memory_space<vmem>>, vector<16x32xf32>,
    return
  }
  func.func @transform_0(%arg0: i32) -> i32 {
    %c0_i32 = arith.constant 0 : i32
    %c0_i32_0 = arith.constant 0 : i32
    return %c0_i32 : i32
  }
  func.func @transform_1(%arg0: i32) -> (i32, i32) {
    %c0_i32 = arith.constant 0 : i32
    %c0_i32_0 = arith.constant 0 : i32
    return %arg0, %c0_i32 : i32, i32
  }
  func.func @transform_2(%arg0: i32) -> (i32, i32) {
    %c0_i32 = arith.constant 0 : i32
    %c0_i32_0 = arith.constant 0 : i32
    return %arg0, %c0_i32 : i32, i32
  }
}

</mosaic_0001>

<llo_original>
// kernel: tpu_custom_call.1
$region0: #{tpu_custom_call.1}
  #allocation0 [shape = 'u32[]', space=smem, size = 0x4, offset = 0x4, fixed_abs, tag = 'smem constant byte address 0x4 - core index']
  #allocation1 [shape = 'u32[144,128]{1,0:T(1,128)}', space=vmem, size = 0x12000, scoped, tag = 'internal scratch']
  %s0 = inlined_call_operand.hbm [shape: f32[2], index: 0, kind: input, shape index: {}]
  %s1 = inlined_call_operand.hbm [shape: f32[16,32], index: 1, kind: input, shape index: {}]
  %s2 = inlined_call_operand.hbm [shape: f32[16,32], index: 2, kind: output, shape index: {}]
  %s3 = sld [smem:[#allocation0]]
  $region26: #{tpu_custom_call.1} parent=0
    _
  %s5 = ssub.s32 1, %s3
  %s6 = scalar_select 0, %s5, %s3
  $region1: #{tpu_custom_call.1} parent=0
    #allocation2 [shape = 'u8[512]{0}', space=smem, size = 0x200, scoped, tag = 'input window, operand 0, single buffered']
    #allocation3 [shape = 's32[1]{0}', space=sflag, size = 0x4, scoped, tag = 'scoped memory for tpu_custom_call.1']
    #allocation4 [shape = 's32[1]{0}', space=sflag, size = 0x4, scoped, tag = 'scoped memory for tpu_custom_call.1']
    #allocation5 [shape = 's32[1]{0}', space=sflag, size = 0x4, scoped, tag = 'scoped memory for tpu_custom_call.1']
    #allocation6 [shape = 'u8[8192]{0}', space=vmem, size = 0x2000, scoped, tag = 'input window, operand 1, single buffered']
    #allocation7 [shape = 'u8[8192]{0}', space=vmem, size = 0x2000, scoped, tag = 'output window, operand 0, single buffered']
    %7 = vsyncpa [#allocation5], 0
    %8 = vsyncpa [#allocation3], 0
    %9 = vsyncpa [#allocation4], 0
    // Predicated region
    $region2: #{tpu_custom_call.1} parent=1 // pred_check
      _
    $region3: #{tpu_custom_call.1} parent=1 // pred_check_branch
      %11 = sbr.rel (0) target = $region5
    $region4: #{tpu_custom_call.1} parent=1 // pred_region
      %s13 = ssub.s32 16, 16
      %14 = vsyncadd [#allocation5], %s13
      %17 = dma.hbm_to_smem %s0, 16, [#allocation2], [#allocation5]
    $region5: #{tpu_custom_call.1} parent=1 // pred_fallthru
      _
    // Predicated region
    $region6: #{tpu_custom_call.1} parent=1 // pred_check
      _
    $region7: #{tpu_custom_call.1} parent=1 // pred_check_branch
      %19 = sbr.rel (0) target = $region9
    $region8: #{tpu_custom_call.1} parent=1 // pred_region
      %s21 = ssub.s32 256, 256
      %22 = vsyncadd [#allocation3], %s21
      %s23 = sshll.u32 [#allocation6], 4
      %s24 = int_to_ptr.vmem [resolvable:$true] %s23
      %29 = dma.hbm_to_vmem [thread:$0]  %s1, 256, %s24, [#allocation3], 128, 128, 8
    $region9: #{tpu_custom_call.1} parent=1 // pred_fallthru
      _
    // Predicated region
    $region10: #{tpu_custom_call.1} parent=1 // pred_check
      _
    $region11: #{tpu_custom_call.1} parent=1 // pred_check_branch
      %31 = sbr.rel (0) target = $region13
    $region12: #{tpu_custom_call.1} parent=1 // pred_region
      %32 = dma.done [#allocation5], 16
    $region13: #{tpu_custom_call.1} parent=1 // pred_fallthru
      _
    // Predicated region
    $region14: #{tpu_custom_call.1} parent=1 // pred_check
      _
    $region15: #{tpu_custom_call.1} parent=1 // pred_check_branch
      %34 = sbr.rel (0) target = $region17
    $region16: #{tpu_custom_call.1} parent=1 // pred_region
      %35 = dma.done [#allocation3], 256
    $region17: #{tpu_custom_call.1} parent=1 // pred_fallthru
      _
    %36 = sfence
    %s37 = sld [smem:[#allocation2]]
    %s38 = sld [smem:[#allocation2 + $0x1]]
    %v39 = vld [vmem:[#allocation6] sm:$0xff]
    %v40 = vld [vmem:[#allocation6 + $0x8] sm:$0xff]
    %vm41 = vcmask 261120
    %v42 = vsel %vm41, %v39, 0.0
    %43 = vadd.xlane.f32.xlu0 %v42
    %v44 = vpop.xlane.xlu0 %43
    %v45 = vsel %vm41, %v40, 0.0
    %46 = vadd.xlane.f32.xlu0 %v45
    %v47 = vpop.xlane.xlu0 %46
    %v48 = vrcp.pop 32.0
    %v49 = vmul.f32 %v44, %v48
    %v50 = vmul.f32 %v47, %v48
    %v51 = vsub.f32 %v39, %v49
    %v52 = vsub.f32 %v40, %v50
    %v53 = vmul.f32 %v51, %v51
    %v54 = vmul.f32 %v52, %v52
    %v55 = vsel %vm41, %v53, 0.0
    %56 = vadd.xlane.f32.xlu0 %v55
    %v57 = vpop.xlane.xlu0 %56
    %v58 = vsel %vm41, %v54, 0.0
    %59 = vadd.xlane.f32.xlu0 %v58
    %v60 = vpop.xlane.xlu0 %59
    %v61 = vmul.f32 %v57, 0.032258064
    %v62 = vmul.f32 %v60, 0.032258064
    %v63 = vrsqrt.pop %v61
    %v64 = vmul.f32 %v61, %v63
    %vm65 = vcmp.eq.f32.partialorder %v61, inf
    %v66 = vsel %vm65, %v61, %v64
    %vm67 = vcmp.eq.f32.partialorder %v61, 0.0
    %v68 = vand.u32 %v61, 2147483648
    %v69 = vsel %vm67, %v68, %v66
    %v70 = vrsqrt.pop %v62
    %v71 = vmul.f32 %v62, %v70
    %vm72 = vcmp.eq.f32.partialorder %v62, inf
    %v73 = vsel %vm72, %v62, %v71
    %vm74 = vcmp.eq.f32.partialorder %v62, 0.0
    %v75 = vand.u32 %v62, 2147483648
    %v76 = vsel %vm74, %v75, %v73
    %v77 = vadd.f32 %v69, 1e-06
    %v78 = vadd.f32 %v76, 1e-06
    %v79 = vstv %s37
    %v80 = vrcp.pop %v77
    %v81 = vmul.f32 %v79, %v80
    %v82 = vrcp.pop %v78
    %v83 = vmul.f32 %v79, %v82
    %v84 = vmul.f32 %v51, %v81
    %v85 = vmul.f32 %v52, %v83
    %v86 = vstv %s38
    %v87 = vadd.f32 %v84, %v86
    %v88 = vadd.f32 %v85, %v86
    %89 = vst.msk [vmem:[#allocation7] sm:$0xff] %vm41, %v87
    %90 = vst.msk [vmem:[#allocation7 + $0x8] sm:$0xff] %vm41, %v88
    // Predicated region
    $region18: #{tpu_custom_call.1} parent=1 // pred_check
      _
    $region19: #{tpu_custom_call.1} parent=1 // pred_check_branch
      %92 = sbr.rel (0) target = $region21
    $region20: #{tpu_custom_call.1} parent=1 // pred_region
      %s94 = ssub.s32 256, 256
      %95 = vsyncadd [#allocation4], %s94
      %s96 = sshll.u32 [#allocation7], 4
      %s97 = int_to_ptr.vmem [resolvable:$true] %s96
      %102 = dma.vmem_to_hbm [thread:$0]  %s97, 256, %s2, [#allocation4], 128, 128, 8
    $region21: #{tpu_custom_call.1} parent=1 // pred_fallthru
      _
    // Predicated region
    $region22: #{tpu_custom_call.1} parent=1 // pred_check
      _
    $region23: #{tpu_custom_call.1} parent=1 // pred_check_branch
      %104 = sbr.rel (0) target = $region25
    $region24: #{tpu_custom_call.1} parent=1 // pred_region
      %105 = dma.done [#allocation4], 256
    $region25: #{tpu_custom_call.1} parent=1 // pred_fallthru
      _
    %106 = vsyncpa [#allocation3], 1
    %107 = vsyncpa [#allocation4], 1
    %108 = vsyncpa [#allocation5], 1

</llo_original>
